<compile_context>
chip_gen: v7x
topology: tpu7x:2x2x1
jax: 0.10.0
libtpu: 0.0.40
codegen_flags: <defaults>
</compile_context>

<pallas_src>
import functools

import jax
import jax.numpy as jnp
from jax import lax
from jax.experimental import pallas as pl
from jax.experimental.pallas import tpu as pltpu


def _round_up(n: int, m: int) -> int:
    return ((n + m - 1) // m) * m


def mlp_kernel(x_ref, w1_ref, b1_ref, w2_ref, b2_ref, o_ref, acc_ref,
               *, hid_chunk: int, n_chunks: int):
    # x arrives as f32 straight from HBM; cast once to bf16 on the VPU
    # (hoisted out of the hidden-chunk loop).
    x_bf = x_ref[...].astype(jnp.bfloat16)

    acc_ref[...] = jnp.zeros_like(acc_ref)

    def body(k, carry):
        off = pl.multiple_of(k * hid_chunk, 128)
        # fc1 chunk: (tb, in_p) @ (in_p, hid_chunk) -- bf16 MXU, f32 acc.
        h = jnp.dot(x_bf, w1_ref[:, pl.ds(off, hid_chunk)],
                    preferred_element_type=jnp.float32)
        # bias + ReLU in f32 on the VPU.
        h = jnp.maximum(h + b1_ref[:, pl.ds(off, hid_chunk)], 0.0)
        # fc2 chunk: accumulate into the f32 VMEM scratch.
        acc_ref[...] += jnp.dot(h.astype(jnp.bfloat16),
                                w2_ref[pl.ds(off, hid_chunk), :],
                                preferred_element_type=jnp.float32)
        return carry

    lax.fori_loop(0, n_chunks, body, 0, unroll=(n_chunks <= 8))
    o_ref[...] = (acc_ref[...] + b2_ref[...]).astype(o_ref.dtype)


def simple_mlp(x, w1, b1, w2, b2, *, tb=256, hid_chunk=512):
    """Fused SimpleMLP forward: relu(x @ w1 + b1) @ w2 + b2.

    x:  (B, input_size) f32
    w1: (input_size, hidden_size)   b1: (hidden_size,)
    w2: (hidden_size, output_size)  b2: (output_size,)
    returns (B, output_size) f32
    """
    B, in_f = x.shape
    hid = w1.shape[1]
    out_f = w2.shape[1]

    # ---- Lane-dense feature padding (multiples of 128) --------------------
    in_p = _round_up(in_f, 128)
    hid_p = _round_up(hid, 128)
    out_p = _round_up(out_f, 128)

    # In-kernel hidden chunking: keeps the live fc1 activation slice small.
    if hid_p <= hid_chunk:
        hid_chunk_eff = hid_p
    else:
        hid_chunk_eff = hid_chunk
        hid_p = _round_up(hid_p, hid_chunk_eff)
    n_chunks = hid_p // hid_chunk_eff

    # ---- Batch tiling ------------------------------------------------------
    b16 = _round_up(B, 16)                 # bf16 sublane packing
    tb_eff = min(tb, b16)
    # If the batch is big enough for two MXU-filling (>=128-row) tiles but
    # would land in a single grid step, split it so v7x's two TensorCores
    # both get work.
    if b16 >= 256 and b16 <= tb_eff:
        tb_eff = _round_up((b16 + 1) // 2, 16)
    b_p = _round_up(b16, tb_eff)
    grid = (b_p // tb_eff,)

    # ---- Operand prep ------------------------------------------------------
    # x stays f32 (cast to bf16 inside the kernel); pad only if needed.
    x_p = x.astype(jnp.float32)
    if (b_p, in_p) != (B, in_f):
        x_p = jnp.pad(x_p, ((0, b_p - B), (0, in_p - in_f)))

    # TODO(synk): if weights are static across calls, hoist this pad/cast out
    # of the per-call path (do it once at parameter-load time).
    w1_p = jnp.pad(w1, ((0, in_p - in_f), (0, hid_p - hid))).astype(jnp.bfloat16)
    w2_p = jnp.pad(w2, ((0, hid_p - hid), (0, out_p - out_f))).astype(jnp.bfloat16)
    b1_p = jnp.pad(b1, (0, hid_p - hid)).reshape(1, hid_p).astype(jnp.float32)
    b2_p = jnp.pad(b2, (0, out_p - out_f)).reshape(1, out_p).astype(jnp.float32)

    # ---- VMEM budget -------------------------------------------------------
    weights_bytes = (in_p * hid_p + hid_p * out_p) * 2 + (hid_p + out_p) * 4
    io_bytes = 2 * tb_eff * in_p * 4 + 2 * tb_eff * out_p * 4   # double-buffered x / out
    scratch_bytes = tb_eff * out_p * 4 + tb_eff * hid_chunk_eff * 4  # acc + live h chunk
    vmem_limit = weights_bytes + io_bytes + scratch_bytes + (4 << 20)  # headroom
    vmem_limit = int(min(max(vmem_limit, 16 << 20), 64 << 20))  # v7x physical ceiling
    # TODO(synk): if weights_bytes alone exceeds ~48 MiB (v7x), stream weight
    # chunks via a trailing "arbitrary" grid axis instead of keeping them resident.

    cost = pl.CostEstimate(
        flops=2 * b_p * (in_p * hid_p + hid_p * out_p),
        transcendentals=0,
        bytes_accessed=(b_p * in_p * 4 + w1_p.size * 2 + w2_p.size * 2
                        + b1_p.size * 4 + b2_p.size * 4 + b_p * out_p * 4),
    )

    resident = pl.Buffered(1)   # constant blocks: no double-buffering needed

    out_padded = pl.pallas_call(
        functools.partial(mlp_kernel, hid_chunk=hid_chunk_eff, n_chunks=n_chunks),
        out_shape=jax.ShapeDtypeStruct((b_p, out_p), jnp.float32),
        grid_spec=pltpu.PrefetchScalarGridSpec(
            num_scalar_prefetch=0,
            grid=grid,
            in_specs=[
                # x: tiled over the batch axis, double-buffered by Pallas.
                pl.BlockSpec((tb_eff, in_p), lambda i: (i, 0)),
                # Weights / biases: same block every step -> resident, single-buffered.
                pl.BlockSpec((in_p, hid_p), lambda i: (0, 0), pipeline_mode=resident),
                pl.BlockSpec((1, hid_p), lambda i: (0, 0), pipeline_mode=resident),
                pl.BlockSpec((hid_p, out_p), lambda i: (0, 0), pipeline_mode=resident),
                pl.BlockSpec((1, out_p), lambda i: (0, 0), pipeline_mode=resident),
            ],
            out_specs=pl.BlockSpec((tb_eff, out_p), lambda i: (i, 0)),
            scratch_shapes=[pltpu.VMEM((tb_eff, out_p), jnp.float32)],
        ),
        compiler_params=pltpu.CompilerParams(
            # Independent batch tiles -> shard across both TCs on v7x megacore.
            dimension_semantics=("parallel",),
            vmem_limit_bytes=vmem_limit,
        ),
        cost_estimate=cost,
    )(x_p, w1_p, b1_p, w2_p, b2_p)

    return out_padded[:B, :out_f]


if __name__ == "__main__":
    # Small shapes consistent with the module: batch=8, input=32, hidden=64, out=16
    batch, input_size, hidden_size, output_size = 8, 32, 64, 16

    key = jax.random.PRNGKey(0)
    kx, kw1, kb1, kw2, kb2 = jax.random.split(key, 5)

    x = jax.random.normal(kx, (batch, input_size), dtype=jnp.float32)

    # Deterministic init mimicking nn.Linear's uniform(-1/sqrt(fan_in), 1/sqrt(fan_in)).
    bound1 = 1.0 / jnp.sqrt(input_size)
    w1 = jax.random.uniform(kw1, (input_size, hidden_size),
                            minval=-bound1, maxval=bound1, dtype=jnp.float32)
    b1 = jax.random.uniform(kb1, (hidden_size,),
                            minval=-bound1, maxval=bound1, dtype=jnp.float32)

    bound2 = 1.0 / jnp.sqrt(hidden_size)
    w2 = jax.random.uniform(kw2, (hidden_size, output_size),
                            minval=-bound2, maxval=bound2, dtype=jnp.float32)
    b2 = jax.random.uniform(kb2, (output_size,),
                            minval=-bound2, maxval=bound2, dtype=jnp.float32)

    out = simple_mlp(x, w1, b1, w2, b2)
    jax.block_until_ready(out)

    # Reference mirrors the kernel's numerics: bf16-quantized matmul operands,
    # f32 accumulation, f32 bias/ReLU.
    xq = x.astype(jnp.bfloat16).astype(jnp.float32)
    w1q = w1.astype(jnp.bfloat16).astype(jnp.float32)
    w2q = w2.astype(jnp.bfloat16).astype(jnp.float32)
    h = jnp.maximum(xq @ w1q + b1, 0.0)
    ref = h.astype(jnp.bfloat16).astype(jnp.float32) @ w2q + b2

    assert out.shape == (batch, output_size)
    assert jnp.allclose(out, ref, atol=2e-2, rtol=2e-2), \
        float(jnp.max(jnp.abs(out - ref)))

    print("KERNEL_OK")
</pallas_src>

<mosaic_0001>
module attributes {stable_mosaic.version = 11 : i64} {
  func.func @mlp_kernel(%arg0: i32, %arg1: memref<16x128xf32, #tpu.memory_space<vmem>>, %arg2: memref<128x128xbf16, #tpu.memory_space<vmem>>, %arg3: memref<1x128xf32, #tpu.memory_space<vmem>>, %arg4: memref<128x128xbf16, #tpu.memory_space<vmem>>, %arg5: memref<1x128xf32, #tpu.memory_space<vmem>>, %arg6: memref<16x128xf32, #tpu.memory_space<vmem>>, %arg7: memref<16x128xf32, #tpu.memory_space<vmem>>) attributes {dimension_semantics = [#tpu.dimension_semantics<parallel>], iteration_bounds = array<i64: 1>, scalar_prefetch = 0 : i64, scratch_operands = 1 : i64, tpu.core_type = #tpu.core_type<tc>, window_params = [{transform_indices = @transform_0, window_bounds = array<i64: 16, 128>}, {pipeline_mode = #tpu.pipeline_mode<synchronous>, transform_indices = @transform_1, window_bounds = array<i64: 128, 128>}, {pipeline_mode = #tpu.pipeline_mode<synchronous>, transform_indices = @transform_2, window_bounds = array<i64: 1, 128>}, {pipeline_mode = #tpu.pipeline_mode<synchronous>, transform_indices = @transform_3, window_bounds = array<i64: 128, 128>}, {pipeline_mode = #tpu.pipeline_mode<synchronous>, transform_indices = @transform_4, window_bounds = array<i64: 1, 128>}, {transform_indices = @transform_5, window_bounds = array<i64: 16, 128>}]} {
    %c0 = arith.constant 0 : index
    %c0_0 = arith.constant 0 : index
    %0 = vector.load %arg1[%c0, %c0_0] : memref<16x128xf32, #tpu.memory_space<vmem>>, vector<16x128xf32>
    %1 = arith.truncf %0 : vector<16x128xf32> to vector<16x128xbf16>
    %cst = arith.constant 0.000000e+00 : f32
    %2 = vector.broadcast %cst : f32 to vector<16x128xf32>
    %c0_1 = arith.constant 0 : index
    %c0_2 = arith.constant 0 : index
    %3 = vector.load %arg7[%c0_1, %c0_2] : memref<16x128xf32, #tpu.memory_space<vmem>>, vector<16x128xf32>
    tpu.vector_store %arg7[%c0_1, %c0_2], %2 {strides = array<i32>} : memref<16x128xf32, #tpu.memory_space<vmem>>, vector<16x128xf32>,
    %c0_i32 = arith.constant 0 : i32
    %c128_i32 = arith.constant 128 : i32
    %4 = arith.muli %c0_i32, %c128_i32 : i32
    %5 = tpu.assume_multiple %4, 128 : i32
    %c0_3 = arith.constant 0 : index
    %6 = arith.index_cast %5 : i32 to index
    %7 = vector.load %arg2[%c0_3, %6] : memref<128x128xbf16, #tpu.memory_space<vmem>>, vector<128x128xbf16>
    %cst_4 = arith.constant dense<0.000000e+00> : vector<16x128xf32>
    %8 = tpu.matmul %1, %7, %cst_4 {dimension_numbers = #tpu.dot_dimension_numbers<[1], [0], [0], [1], [0, 0, 1, 1], [], []>} : vector<16x128xbf16>, vector<128x128xbf16>, vector<16x128xf32> -> vector<16x128xf32>
    %c0_5 = arith.constant 0 : index
    %9 = arith.index_cast %5 : i32 to index
    %10 = vector.load %arg3[%c0_5, %9] : memref<1x128xf32, #tpu.memory_space<vmem>>, vector<1x128xf32>
    %11 = vector.broadcast %10 : vector<1x128xf32> to vector<16x128xf32>
    %12 = arith.addf %8, %11 : vector<16x128xf32>
    %cst_6 = arith.constant 0.000000e+00 : f32
    %13 = vector.broadcast %cst_6 : f32 to vector<16x128xf32>
    %14 = arith.maximumf %12, %13 : vector<16x128xf32>
    %c0_7 = arith.constant 0 : index
    %c0_8 = arith.constant 0 : index
    %15 = vector.load %arg7[%c0_7, %c0_8] : memref<16x128xf32, #tpu.memory_space<vmem>>, vector<16x128xf32>
    %16 = arith.truncf %14 : vector<16x128xf32> to vector<16x128xbf16>
    %17 = arith.index_cast %5 : i32 to index
    %c0_9 = arith.constant 0 : index
    %18 = vector.load %arg4[%17, %c0_9] : memref<128x128xbf16, #tpu.memory_space<vmem>>, vector<128x128xbf16>
    %cst_10 = arith.constant dense<0.000000e+00> : vector<16x128xf32>
    %19 = tpu.matmul %16, %18, %cst_10 {dimension_numbers = #tpu.dot_dimension_numbers<[1], [0], [0], [1], [0, 0, 1, 1], [], []>} : vector<16x128xbf16>, vector<128x128xbf16>, vector<16x128xf32> -> vector<16x128xf32>
    %20 = arith.addf %15, %19 : vector<16x128xf32>
    %c0_11 = arith.constant 0 : index
    %c0_12 = arith.constant 0 : index
    %21 = vector.load %arg7[%c0_11, %c0_12] : memref<16x128xf32, #tpu.memory_space<vmem>>, vector<16x128xf32>
    tpu.vector_store %arg7[%c0_11, %c0_12], %20 {strides = array<i32>} : memref<16x128xf32, #tpu.memory_space<vmem>>, vector<16x128xf32>,
    %c1_i32 = arith.constant 1 : i32
    %c0_13 = arith.constant 0 : index
    %c0_14 = arith.constant 0 : index
    %22 = vector.load %arg7[%c0_13, %c0_14] : memref<16x128xf32, #tpu.memory_space<vmem>>, vector<16x128xf32>
    %c0_15 = arith.constant 0 : index
    %c0_16 = arith.constant 0 : index
    %23 = vector.load %arg5[%c0_15, %c0_16] : memref<1x128xf32, #tpu.memory_space<vmem>>, vector<1x128xf32>
    %24 = vector.broadcast %23 : vector<1x128xf32> to vector<16x128xf32>
    %25 = arith.addf %22, %24 : vector<16x128xf32>
    %c0_17 = arith.constant 0 : index
    %c0_18 = arith.constant 0 : index
    %26 = vector.load %arg6[%c0_17, %c0_18] : memref<16x128xf32, #tpu.memory_space<vmem>>, vector<16x128xf32>
    tpu.vector_store %arg6[%c0_17, %c0_18], %25 {strides = array<i32>} : memref<16x128xf32, #tpu.memory_space<vmem>>, vector<16x128xf32>,
    return
  }
  func.func @transform_0(%arg0: i32) -> (i32, i32) {
    %c0_i32 = arith.constant 0 : i32
    %c0_i32_0 = arith.constant 0 : i32
    return %arg0, %c0_i32 : i32, i32
  }
  func.func @transform_1(%arg0: i32) -> (i32, i32) {
    %c0_i32 = arith.constant 0 : i32
    %c0_i32_0 = arith.constant 0 : i32
    %c0_i32_1 = arith.constant 0 : i32
    return %c0_i32, %c0_i32_0 : i32, i32
  }
  func.func @transform_2(%arg0: i32) -> (i32, i32) {
    %c0_i32 = arith.constant 0 : i32
    %c0_i32_0 = arith.constant 0 : i32
    %c0_i32_1 = arith.constant 0 : i32
    return %c0_i32, %c0_i32_0 : i32, i32
  }
  func.func @transform_3(%arg0: i32) -> (i32, i32) {
    %c0_i32 = arith.constant 0 : i32
    %c0_i32_0 = arith.constant 0 : i32
    %c0_i32_1 = arith.constant 0 : i32
    return %c0_i32, %c0_i32_0 : i32, i32
  }
  func.func @transform_4(%arg0: i32) -> (i32, i32) {
    %c0_i32 = arith.constant 0 : i32
    %c0_i32_0 = arith.constant 0 : i32
    %c0_i32_1 = arith.constant 0 : i32
    return %c0_i32, %c0_i32_0 : i32, i32
  }
  func.func @transform_5(%arg0: i32) -> (i32, i32) {
    %c0_i32 = arith.constant 0 : i32
    %c0_i32_0 = arith.constant 0 : i32
    return %arg0, %c0_i32 : i32, i32
  }
}

</mosaic_0001>

<llo_original>
// kernel: tpu_custom_call.1
$region0: #{tpu_custom_call.1}
  #allocation0 [shape = 'u32[]', space=smem, size = 0x4, offset = 0x4, fixed_abs, tag = 'smem constant byte address 0x4 - core index']
  #allocation1 [shape = 'u32[144,128]{1,0:T(1,128)}', space=vmem, size = 0x12000, scoped, tag = 'internal scratch']
  #allocation2 [shape = 'f32[16,128]{1,0:T(8,128)}', space=vmem, size = 0x2000, scoped, tag = 'scratch operand']
  %s0 = inlined_call_operand.hbm [shape: f32[16,128], index: 0, kind: input, shape index: {}]
  %s1 = inlined_call_operand.hbm [shape: bf16[128,128], index: 1, kind: input, shape index: {}]
  %s2 = inlined_call_operand.vmem [shape: f32[1,128], index: 2, kind: input, shape index: {}]
  %s3 = inlined_call_operand.hbm [shape: bf16[128,128], index: 3, kind: input, shape index: {}]
  %s4 = inlined_call_operand.vmem [shape: f32[1,128], index: 4, kind: input, shape index: {}]
  %s5 = inlined_call_operand.hbm [shape: f32[16,128], index: 5, kind: output, shape index: {}]
  %s6 = sld [smem:[#allocation0]]
  $region42: #{tpu_custom_call.1} parent=0
    _
  %s8 = ssub.s32 1, %s6
  %s9 = scalar_select 0, %s8, %s6
  $region1: #{tpu_custom_call.1} parent=0
    #allocation3 [shape = 'u8[8192]{0}', space=vmem, size = 0x2000, scoped, tag = 'input window, operand 0, single buffered']
    #allocation4 [shape = 's32[1]{0}', space=sflag, size = 0x4, scoped, tag = 'scoped memory for tpu_custom_call.1']
    #allocation5 [shape = 's32[1]{0}', space=sflag, size = 0x4, scoped, tag = 'scoped memory for tpu_custom_call.1']
    #allocation6 [shape = 'u8[32768]{0}', space=vmem, size = 0x8000, scoped, tag = 'input window, operand 1, single buffered']
    #allocation7 [shape = 's32[1]{0}', space=sflag, size = 0x4, scoped, tag = 'scoped memory for tpu_custom_call.1']
    #allocation8 [shape = 'u8[32768]{0}', space=vmem, size = 0x8000, scoped, tag = 'input window, operand 3, single buffered']
    #allocation9 [shape = 'u8[8192]{0}', space=vmem, size = 0x2000, scoped, tag = 'output window, operand 0, single buffered']
    %10 = vsyncpa [#allocation4], 0
    %11 = vsyncpa [#allocation7], 0
    %12 = vsyncpa [#allocation5], 0
    // Predicated region
    $region2: #{tpu_custom_call.1} parent=1 // pred_check
      _
    $region3: #{tpu_custom_call.1} parent=1 // pred_check_branch
      %14 = sbr.rel (0) target = $region5
    $region4: #{tpu_custom_call.1} parent=1 // pred_region
      %s16 = ssub.s32 256, 256
      %17 = vsyncadd [#allocation4], %s16
      %s18 = sshll.u32 [#allocation3], 4
      %s19 = int_to_ptr.vmem [resolvable:$true] %s18
      %24 = dma.hbm_to_vmem [thread:$0]  %s0, 256, %s19, [#allocation4], 128, 128, 8
    $region5: #{tpu_custom_call.1} parent=1 // pred_fallthru
      _
    // Predicated region
    $region6: #{tpu_custom_call.1} parent=1 // pred_check
      _
    $region7: #{tpu_custom_call.1} parent=1 // pred_check_branch
      %26 = sbr.rel (0) target = $region9
    $region8: #{tpu_custom_call.1} parent=1 // pred_region
      %s28 = ssub.s32 1024, 1024
      %29 = vsyncadd [#allocation7], %s28
      %s30 = sshll.u32 [#allocation6], 4
      %s31 = int_to_ptr.vmem [resolvable:$true] %s30
      %36 = dma.hbm_to_vmem [thread:$0]  %s1, 1024, %s31, [#allocation7], 64, 64, 4
    $region9: #{tpu_custom_call.1} parent=1 // pred_fallthru
      _
    // Predicated region
    $region10: #{tpu_custom_call.1} parent=1 // pred_check
      _
    $region11: #{tpu_custom_call.1} parent=1 // pred_check_branch
      %38 = sbr.rel (0) target = $region13
    $region12: #{tpu_custom_call.1} parent=1 // pred_region
      _
    $region13: #{tpu_custom_call.1} parent=1 // pred_fallthru
      _
    // Predicated region
    $region14: #{tpu_custom_call.1} parent=1 // pred_check
      _
    $region15: #{tpu_custom_call.1} parent=1 // pred_check_branch
      %40 = sbr.rel (0) target = $region17
    $region16: #{tpu_custom_call.1} parent=1 // pred_region
      %s42 = ssub.s32 1024, 1024
      %43 = vsyncadd [#allocation7], %s42
      %s44 = sshll.u32 [#allocation8], 4
      %s45 = int_to_ptr.vmem [resolvable:$true] %s44
      %50 = dma.hbm_to_vmem [thread:$0]  %s3, 1024, %s45, [#allocation7], 64, 64, 4
    $region17: #{tpu_custom_call.1} parent=1 // pred_fallthru
      _
    // Predicated region
    $region18: #{tpu_custom_call.1} parent=1 // pred_check
      _
    $region19: #{tpu_custom_call.1} parent=1 // pred_check_branch
      %52 = sbr.rel (0) target = $region21
    $region20: #{tpu_custom_call.1} parent=1 // pred_region
      _
    $region21: #{tpu_custom_call.1} parent=1 // pred_fallthru
      _
    // Predicated region
    $region22: #{tpu_custom_call.1} parent=1 // pred_check
      _
    $region23: #{tpu_custom_call.1} parent=1 // pred_check_branch
      %54 = sbr.rel (0) target = $region25
    $region24: #{tpu_custom_call.1} parent=1 // pred_region
      %55 = dma.done [#allocation4], 256
    $region25: #{tpu_custom_call.1} parent=1 // pred_fallthru
      _
    // Predicated region
    $region26: #{tpu_custom_call.1} parent=1 // pred_check
      _
    $region27: #{tpu_custom_call.1} parent=1 // pred_check_branch
      %57 = sbr.rel (0) target = $region29
    $region28: #{tpu_custom_call.1} parent=1 // pred_region
      %58 = dma.done [#allocation7], 1024
    $region29: #{tpu_custom_call.1} parent=1 // pred_fallthru
      _
    // Predicated region
    $region30: #{tpu_custom_call.1} parent=1 // pred_check
      _
    $region31: #{tpu_custom_call.1} parent=1 // pred_check_branch
      %60 = sbr.rel (0) target = $region33
    $region32: #{tpu_custom_call.1} parent=1 // pred_region
      %61 = dma.done [#allocation7], 1024
    $region33: #{tpu_custom_call.1} parent=1 // pred_fallthru
      _
    %v63 = vld [vmem:[#allocation3] sm:$0xff]
    %v64 = vld [vmem:[#allocation3 + $0x8] sm:$0xff]
    %v65 = vpack.c.bf16 %v64, %v63
    %66 = vst [vmem:[#allocation2] sm:$0xff] 0.0
    %67 = vst [vmem:[#allocation2 + $0x8] sm:$0xff] 0.0
    %v68 = vld [vmem:[#allocation6] sm:$0xf]
    %v69 = vld [vmem:[#allocation6 + $0x4] sm:$0xf]
    %v70 = vld [vmem:[#allocation6 + $0x8] sm:$0xf]
    %v71 = vld [vmem:[#allocation6 + $0xc] sm:$0xf]
    %v72 = vld [vmem:[#allocation6 + $0x10] sm:$0xf]
    %v73 = vld [vmem:[#allocation6 + $0x14] sm:$0xf]
    %v74 = vld [vmem:[#allocation6 + $0x18] sm:$0xf]
    %v75 = vld [vmem:[#allocation6 + $0x1c] sm:$0xf]
    %v76 = vld [vmem:[#allocation6 + $0x20] sm:$0xf]
    %v77 = vld [vmem:[#allocation6 + $0x24] sm:$0xf]
    %v78 = vld [vmem:[#allocation6 + $0x28] sm:$0xf]
    %v79 = vld [vmem:[#allocation6 + $0x2c] sm:$0xf]
    %v80 = vld [vmem:[#allocation6 + $0x30] sm:$0xf]
    %v81 = vld [vmem:[#allocation6 + $0x34] sm:$0xf]
    %v82 = vld [vmem:[#allocation6 + $0x38] sm:$0xf]
    %v83 = vld [vmem:[#allocation6 + $0x3c] sm:$0xf]
    %v84 = vld [vmem:[%s2] sm:$0x1]
    %v86 = vlaneseq
    %v87 = vshrl.u32 %v86, 7
    %v88 = vsub.s32 0, %v87
    %v89 = vrot.slane %v84, %v88
    %v107 = vunpack.c.l.b16 %v68
    %v108 = vunpack.c.l.b16 %v69
    %v109 = vunpack.c.l.b16 %v70
    %v110 = vunpack.c.l.b16 %v71
    %v111 = vunpack.c.l.b16 %v72
    %v112 = vunpack.c.l.b16 %v73
    %v113 = vunpack.c.l.b16 %v74
    %v114 = vunpack.c.l.b16 %v75
    %v115 = vunpack.c.l.b16 %v76
    %v116 = vunpack.c.l.b16 %v77
    %v117 = vunpack.c.l.b16 %v78
    %v118 = vunpack.c.l.b16 %v79
    %v119 = vunpack.c.l.b16 %v80
    %v120 = vunpack.c.l.b16 %v81
    %v121 = vunpack.c.l.b16 %v82
    %v122 = vunpack.c.l.b16 %v83
    %v123 = vpack.c.b16 %v108, %v107
    %v124 = vpack.c.b16 %v110, %v109
    %v125 = vpack.c.b16 %v112, %v111
    %v126 = vpack.c.b16 %v114, %v113
    %v127 = vpack.c.b16 %v116, %v115
    %v128 = vpack.c.b16 %v118, %v117
    %v129 = vpack.c.b16 %v120, %v119
    %v130 = vpack.c.b16 %v122, %v121
    %139 = vmatprep.subr.bf16.mxu0 0
    %140 = vmatpush1.bf16.msra.mxu0 %v123
    %141 = vmatprep.subr.bf16.mxu0 0
    %142 = vmatpush1.bf16.msra.mxu0 %v124
    %143 = vmatprep.subr.bf16.mxu0 0
    %144 = vmatpush1.bf16.msra.mxu0 %v125
    %145 = vmatprep.subr.bf16.mxu0 0
    %146 = vmatpush1.bf16.msra.mxu0 %v126
    %147 = vmatprep.subr.bf16.mxu0 0
    %148 = vmatpush1.bf16.msra.mxu0 %v127
    %149 = vmatprep.subr.bf16.mxu0 0
    %150 = vmatpush1.bf16.msra.mxu0 %v128
    %151 = vmatprep.subr.bf16.mxu0 0
    %152 = vmatpush1.bf16.msra.mxu0 %v129
    %153 = vmatprep.subr.bf16.mxu0 0
    %154 = vmatpush1.bf16.msra.mxu0 %v130
    %155 = vmatprep.subr.bf16.mxu0 0
    %156 = vmatpush1.bf16.msra.mxu0 0
    %157 = vmatprep.subr.bf16.mxu0 0
    %158 = vmatpush1.bf16.msra.mxu0 0
    %159 = vmatprep.subr.bf16.mxu0 0
    %160 = vmatpush1.bf16.msra.mxu0 0
    %161 = vmatprep.subr.bf16.mxu0 0
    %162 = vmatpush1.bf16.msra.mxu0 0
    %163 = vmatprep.subr.bf16.mxu0 0
    %164 = vmatpush1.bf16.msra.mxu0 0
    %165 = vmatprep.subr.bf16.mxu0 0
    %166 = vmatpush1.bf16.msra.mxu0 0
    %167 = vmatprep.subr.bf16.mxu0 0
    %168 = vmatpush1.bf16.msra.mxu0 0
    %169 = vmatprep.subr.bf16.mxu0 0
    %170 = vmatpush1.bf16.msra.mxu0 0
    %171 = vmatprep.mubr.bf16.mxu0 0
    %172 = vmatmul.mubr.bf16.gmra.mrb[0].mxu0 %v65
    %v173 = vpop.f32.mrb[0].mxu0
    %v174 = vadd.f32 %v89, %v173
    %v175 = vpop.f32.mrb[0].mxu0
    %v176 = vpop.f32.mrb[0].mxu0
    %v177 = vadd.f32 %v89, %v176
    %v178 = vpop.f32.mrb[0].mxu0
    %179 = vdwg.mxu0
    %v180 = vmax.f32 %v174, 0.0
    %v181 = vmax.f32 %v177, 0.0
    %v182 = vld [vmem:[#allocation2] sm:$0xff]
    %v183 = vld [vmem:[#allocation2 + $0x8] sm:$0xff]
    %v184 = vpack.c.bf16 %v181, %v180
    %v185 = vld [vmem:[#allocation8] sm:$0xf]
    %v186 = vld [vmem:[#allocation8 + $0x4] sm:$0xf]
    %v187 = vld [vmem:[#allocation8 + $0x8] sm:$0xf]
    %v188 = vld [vmem:[#allocation8 + $0xc] sm:$0xf]
    %v189 = vld [vmem:[#allocation8 + $0x10] sm:$0xf]
    %v190 = vld [vmem:[#allocation8 + $0x14] sm:$0xf]
    %v191 = vld [vmem:[#allocation8 + $0x18] sm:$0xf]
    %v192 = vld [vmem:[#allocation8 + $0x1c] sm:$0xf]
    %v193 = vld [vmem:[#allocation8 + $0x20] sm:$0xf]
    %v194 = vld [vmem:[#allocation8 + $0x24] sm:$0xf]
    %v195 = vld [vmem:[#allocation8 + $0x28] sm:$0xf]
    %v196 = vld [vmem:[#allocation8 + $0x2c] sm:$0xf]
    %v197 = vld [vmem:[#allocation8 + $0x30] sm:$0xf]
    %v198 = vld [vmem:[#allocation8 + $0x34] sm:$0xf]
    %v199 = vld [vmem:[#allocation8 + $0x38] sm:$0xf]
    %v200 = vld [vmem:[#allocation8 + $0x3c] sm:$0xf]
    %v217 = vunpack.c.l.b16 %v185
    %v218 = vunpack.c.l.b16 %v186
    %v219 = vunpack.c.l.b16 %v187
    %v220 = vunpack.c.l.b16 %v188
    %v221 = vunpack.c.l.b16 %v189
    %v222 = vunpack.c.l.b16 %v190
    %v223 = vunpack.c.l.b16 %v191
    %v224 = vunpack.c.l.b16 %v192
    %v225 = vunpack.c.l.b16 %v193
    %v226 = vunpack.c.l.b16 %v194
    %v227 = vunpack.c.l.b16 %v195
    %v228 = vunpack.c.l.b16 %v196
    %v229 = vunpack.c.l.b16 %v197
    %v230 = vunpack.c.l.b16 %v198
    %v231 = vunpack.c.l.b16 %v199
    %v232 = vunpack.c.l.b16 %v200
    %v233 = vpack.c.b16 %v218, %v217
    %v234 = vpack.c.b16 %v220, %v219
    %v235 = vpack.c.b16 %v222, %v221
    %v236 = vpack.c.b16 %v224, %v223
    %v237 = vpack.c.b16 %v226, %v225
    %v238 = vpack.c.b16 %v228, %v227
    %v239 = vpack.c.b16 %v230, %v229
    %v240 = vpack.c.b16 %v232, %v231
    %249 = vmatprep.subr.bf16.mxu0 0
    %250 = vmatpush1.bf16.msra.mxu0 %v233
    %251 = vmatprep.subr.bf16.mxu0 0
    %252 = vmatpush1.bf16.msra.mxu0 %v234
    %253 = vmatprep.subr.bf16.mxu0 0
    %254 = vmatpush1.bf16.msra.mxu0 %v235
    %255 = vmatprep.subr.bf16.mxu0 0
    %256 = vmatpush1.bf16.msra.mxu0 %v236
    %257 = vmatprep.subr.bf16.mxu0 0
    %258 = vmatpush1.bf16.msra.mxu0 %v237
    %259 = vmatprep.subr.bf16.mxu0 0
    %260 = vmatpush1.bf16.msra.mxu0 %v238
    %261 = vmatprep.subr.bf16.mxu0 0
    %262 = vmatpush1.bf16.msra.mxu0 %v239
    %263 = vmatprep.subr.bf16.mxu0 0
    %264 = vmatpush1.bf16.msra.mxu0 %v240
    %265 = vmatprep.subr.bf16.mxu0 0
    %266 = vmatpush1.bf16.msra.mxu0 0
    %267 = vmatprep.subr.bf16.mxu0 0
    %268 = vmatpush1.bf16.msra.mxu0 0
    %269 = vmatprep.subr.bf16.mxu0 0
    %270 = vmatpush1.bf16.msra.mxu0 0
    %271 = vmatprep.subr.bf16.mxu0 0
    %272 = vmatpush1.bf16.msra.mxu0 0
    %273 = vmatprep.subr.bf16.mxu0 0
    %274 = vmatpush1.bf16.msra.mxu0 0
    %275 = vmatprep.subr.bf16.mxu0 0
    %276 = vmatpush1.bf16.msra.mxu0 0
    %277 = vmatprep.subr.bf16.mxu0 0
    %278 = vmatpush1.bf16.msra.mxu0 0
    %279 = vmatprep.subr.bf16.mxu0 0
    %280 = vmatpush1.bf16.msra.mxu0 0
    %281 = vmatprep.mubr.bf16.mxu0 0
    %282 = vmatmul.mubr.bf16.gmra.mrb[0].mxu0 %v184
    %v283 = vpop.f32.mrb[0].mxu0
    %v284 = vadd.f32 0.0, %v283
    %v285 = vpop.f32.mrb[0].mxu0
    %v286 = vpop.f32.mrb[0].mxu0
    %v287 = vadd.f32 0.0, %v286
    %v288 = vpop.f32.mrb[0].mxu0
    %289 = vdwg.mxu0
    %v290 = vadd.f32 %v182, %v284
    %v291 = vadd.f32 %v183, %v287
    %292 = vst [vmem:[#allocation2] sm:$0xff] %v290
    %293 = vst [vmem:[#allocation2 + $0x8] sm:$0xff] %v291
    %v294 = vld [vmem:[#allocation2] sm:$0xff]
    %v295 = vld [vmem:[#allocation2 + $0x8] sm:$0xff]
    %v296 = vld [vmem:[%s4] sm:$0x1]
    %v298 = vlaneseq
    %v299 = vshrl.u32 %v298, 7
    %v300 = vsub.s32 0, %v299
    %v301 = vrot.slane %v296, %v300
    %v303 = vadd.f32 %v294, %v301
    %v304 = vadd.f32 %v295, %v301
    %305 = vst [vmem:[#allocation9] sm:$0xff] %v303
    %306 = vst [vmem:[#allocation9 + $0x8] sm:$0xff] %v304
    // Predicated region
    $region34: #{tpu_custom_call.1} parent=1 // pred_check
      _
    $region35: #{tpu_custom_call.1} parent=1 // pred_check_branch
      %308 = sbr.rel (0) target = $region37
    $region36: #{tpu_custom_call.1} parent=1 // pred_region
      %s310 = ssub.s32 256, 256
      %311 = vsyncadd [#allocation5], %s310
      %s312 = sshll.u32 [#allocation9], 4
      %s313 = int_to_ptr.vmem [resolvable:$true] %s312
      %318 = dma.vmem_to_hbm [thread:$0]  %s313, 256, %s5, [#allocation5], 128, 128, 8
    $region37: #{tpu_custom_call.1} parent=1 // pred_fallthru
      _
    // Predicated region
    $region38: #{tpu_custom_call.1} parent=1 // pred_check
      _
    $region39: #{tpu_custom_call.1} parent=1 // pred_check_branch
      %320 = sbr.rel (0) target = $region41
    $region40: #{tpu_custom_call.1} parent=1 // pred_region
      %321 = dma.done [#allocation5], 256
    $region41: #{tpu_custom_call.1} parent=1 // pred_fallthru
      _
    %322 = vsyncpa [#allocation4], 1
    %323 = vsyncpa [#allocation7], 1
    %324 = vsyncpa [#allocation5], 1

</llo_original>
